<compile_context>
chip_gen: v5e
topology: v5e:2x2
jax: 0.10.0
libtpu: 0.0.40
codegen_flags: <defaults>
</compile_context>

<pallas_src>
import jax
import jax.numpy as jnp
from jax import lax
from jax.experimental import pallas as pl
from jax.experimental.pallas import tpu as pltpu

IN_FEATURES = 42
HIDDEN = 7
OUT_FEATURES = 7


def mlp_kernel(x_ref, w1_ref, b1_ref, w2_ref, b2_ref, w3_ref, b3_ref, o_ref):
    # Entire MLP hot path for one batch tile: three small matmuls (MXU) +
    # bias adds + ReLUs (VPU), all resident in VMEM.
    x = x_ref[...]                                               # [tb, 42]

    h1 = jnp.dot(x, w1_ref[...], preferred_element_type=jnp.float32)
    h1 = jnp.maximum(h1 + b1_ref[...], 0.0)                      # ReLU
    # Dropout(p=0.8): identity in eval mode.

    h2 = jnp.dot(h1, w2_ref[...], preferred_element_type=jnp.float32)
    h2 = jnp.maximum(h2 + b2_ref[...], 0.0)                      # ReLU
    # Dropout(p=0.3): identity in eval mode.

    # Final layer in NT orientation: contract w3 [out, in] and h2 [tb, in] on
    # their trailing dims -> logits come out transposed as [out, tb], i.e.
    # lane-dense (7 sublanes x tb lanes) for unmasked stores + dense writeback.
    logits_t = lax.dot_general(
        w3_ref[...], h2, (((1,), (1,)), ((), ())),
        preferred_element_type=jnp.float32)                      # [7, tb]
    o_ref[...] = (logits_t + b3_ref[...]).astype(o_ref.dtype)    # b3 is [7, 1]


def _round_up(n, m):
    return ((n + m - 1) // m) * m


def _tile_config():
    """Returns (tb_max, vmem_limit_bytes, multi_core) for this TPU generation."""
    try:
        kind = jax.devices()[0].device_kind.lower()
    except Exception:
        kind = ""
    if "v6" in kind:                       # v6e: 128 MiB VMEM, 1 TC
        return 16384, 96 * 1024 * 1024, False
    if "v5p" in kind or "v4" in kind:      # megacore chips: 2 TCs
        return 8192, 64 * 1024 * 1024, True
    if "v5" in kind:                       # v5e: 128 MiB VMEM, 1 TC, ~820 GB/s
        return 8192, 64 * 1024 * 1024, False
    if "v7" in kind:                       # v7x: 64 MiB VMEM per TC, 2 TCs
        return 8192, 48 * 1024 * 1024, True
    # Unknown: conservative (fits a 64 MiB/TC budget, assume 2 TCs).
    return 8192, 48 * 1024 * 1024, True


def model2_forward(x, params):
    """x: [B, ...] with prod(...) == 42.  Returns logits [B, 7]."""
    B = x.shape[0]
    x2d = x.reshape(B, -1)                                       # nn.Flatten
    assert x2d.shape[1] == IN_FEATURES, x2d.shape

    w1, b1, w2, b2, w3, b3 = params
    tb_max, vmem_limit, multi_core = _tile_config()

    # Ragged-batch handling: split B into near-equal tiles instead of padding
    # up to a full tb_max tile (which can nearly double work, e.g. B=tb_max+1).
    num_tiles = -(-B // tb_max)
    if multi_core and B >= 4096:
        # Keep the "parallel" grid axis shardable across both TensorCores.
        num_tiles = max(num_tiles, 2)
        num_tiles += num_tiles % 2        # even number of steps
    if num_tiles == 1:
        tb = _round_up(B, 8)              # block == full array; 8-sublane granule
    else:
        # tb is also the lane dim of the (7, tb) output block -> multiple of 128.
        tb = _round_up(-(-B // num_tiles), 128)
    b_pad = num_tiles * tb

    if b_pad != B:
        # Zero-pad the ragged batch tail; padded rows are sliced off below.
        x2d = jnp.pad(x2d, ((0, b_pad - B), (0, 0)))

    cost = pl.CostEstimate(
        flops=2 * b_pad * (IN_FEATURES * HIDDEN
                           + HIDDEN * HIDDEN
                           + HIDDEN * OUT_FEATURES),
        transcendentals=0,
        bytes_accessed=4 * (b_pad * (IN_FEATURES + OUT_FEATURES)
                            + IN_FEATURES * HIDDEN + 2 * HIDDEN * HIDDEN
                            + 2 * HIDDEN + OUT_FEATURES),
    )

    const = lambda i: (0, 0)  # weights/biases: same block every step (resident)
    out_t = pl.pallas_call(
        mlp_kernel,
        out_shape=jax.ShapeDtypeStruct((OUT_FEATURES, b_pad), jnp.float32),
        grid=(num_tiles,),
        in_specs=[
            pl.BlockSpec((tb, IN_FEATURES), lambda i: (i, 0)),   # x: streamed
            pl.BlockSpec((IN_FEATURES, HIDDEN), const),          # w1  [42, 7]
            pl.BlockSpec((1, HIDDEN), const),                    # b1  [1, 7]
            pl.BlockSpec((HIDDEN, HIDDEN), const),               # w2  [7, 7]
            pl.BlockSpec((1, HIDDEN), const),                    # b2  [1, 7]
            pl.BlockSpec((OUT_FEATURES, HIDDEN), const),         # w3  [7, 7] (out, in)
            pl.BlockSpec((OUT_FEATURES, 1), const),              # b3  [7, 1]
        ],
        out_specs=pl.BlockSpec((OUT_FEATURES, tb), lambda i: (0, i)),  # lane-dense
        compiler_params=pltpu.CompilerParams(
            dimension_semantics=("parallel",),     # megacore sharding (v7x/v4/v5p)
            vmem_limit_bytes=vmem_limit,
        ),
        cost_estimate=cost,
    )(x2d, w1, b1, w2, b2, w3, b3)

    # Kernel emits lane-dense [7, b_pad]; present the module-facing [B, 7].
    # (The transpose touches only the small output; consumers able to take
    #  [7, B] should use `out_t` directly and skip it.)
    return out_t[:, :B].T


def init_params(key):
    """Deterministic init matching the PyTorch layer shapes.

    PyTorch nn.Linear(in, out): weight [out, in], bias [out],
    uniform(-1/sqrt(in), 1/sqrt(in)).  Layers 1-2 are stored pre-transposed to
    [in, out] (kernel computes x @ W); layer 3 keeps PyTorch's [out, in]
    orientation because the kernel's last matmul contracts trailing dims (NT).
    Biases: b1, b2 as [1, out] rows; b3 as [out, 1] column.
    """
    def uniform(k, shape, fan_in):
        bound = 1.0 / jnp.sqrt(float(fan_in))
        return jax.random.uniform(k, shape, jnp.float32, -bound, bound)

    k1w, k1b, k2w, k2b, k3w, k3b = jax.random.split(key, 6)
    w1 = uniform(k1w, (IN_FEATURES, HIDDEN), IN_FEATURES)
    b1 = uniform(k1b, (1, HIDDEN), IN_FEATURES)
    w2 = uniform(k2w, (HIDDEN, HIDDEN), HIDDEN)
    b2 = uniform(k2b, (1, HIDDEN), HIDDEN)
    w3 = uniform(k3w, (OUT_FEATURES, HIDDEN), HIDDEN)     # [out, in]
    b3 = uniform(k3b, (OUT_FEATURES, 1), HIDDEN)          # [out, 1]
    return (w1, b1, w2, b2, w3, b3)


if __name__ == "__main__":
    key = jax.random.PRNGKey(0)
    k_params, k_x = jax.random.split(key)

    params = init_params(k_params)
    # Small input consistent with Flatten -> Linear(42, ...): [B, 6, 7].
    x = jax.random.normal(k_x, (8, 6, 7), jnp.float32)

    logits = model2_forward(x, params)
    logits = jax.block_until_ready(logits)

    # Pure-JAX reference to sanity-check the kernel (eval-mode dropout).
    x2d = x.reshape(8, -1)
    w1, b1, w2, b2, w3, b3 = params
    ref = jnp.maximum(x2d @ w1 + b1, 0.0)
    ref = jnp.maximum(ref @ w2 + b2, 0.0)
    ref = ref @ w3.T + b3.T                                # w3 is [out, in]
    assert logits.shape == (8, 7)
    assert jnp.allclose(logits, ref, atol=1e-5, rtol=1e-5)

    print("KERNEL_OK")
</pallas_src>

<mosaic_0001>
module attributes {stable_mosaic.version = 11 : i64} {
  func.func @mlp_kernel(%arg0: i32, %arg1: memref<8x42xf32, #tpu.memory_space<vmem>>, %arg2: memref<42x7xf32, #tpu.memory_space<vmem>>, %arg3: memref<1x7xf32, #tpu.memory_space<vmem>>, %arg4: memref<7x7xf32, #tpu.memory_space<vmem>>, %arg5: memref<1x7xf32, #tpu.memory_space<vmem>>, %arg6: memref<7x7xf32, #tpu.memory_space<vmem>>, %arg7: memref<7x1xf32, #tpu.memory_space<vmem>>, %arg8: memref<7x8xf32, #tpu.memory_space<vmem>>) attributes {dimension_semantics = [#tpu.dimension_semantics<parallel>], iteration_bounds = array<i64: 1>, scalar_prefetch = 0 : i64, scratch_operands = 0 : i64, tpu.core_type = #tpu.core_type<tc>, window_params = [{transform_indices = @transform_0, window_bounds = array<i64: 8, 42>}, {pipeline_mode = #tpu.pipeline_mode<synchronous>, transform_indices = @transform_1, window_bounds = array<i64: 42, 7>}, {pipeline_mode = #tpu.pipeline_mode<synchronous>, transform_indices = @transform_2, window_bounds = array<i64: 1, 7>}, {pipeline_mode = #tpu.pipeline_mode<synchronous>, transform_indices = @transform_3, window_bounds = array<i64: 7, 7>}, {pipeline_mode = #tpu.pipeline_mode<synchronous>, transform_indices = @transform_4, window_bounds = array<i64: 1, 7>}, {pipeline_mode = #tpu.pipeline_mode<synchronous>, transform_indices = @transform_5, window_bounds = array<i64: 7, 7>}, {pipeline_mode = #tpu.pipeline_mode<synchronous>, transform_indices = @transform_6, window_bounds = array<i64: 7, 1>}, {transform_indices = @transform_7, window_bounds = array<i64: 7, 8>}]} {
    %c0 = arith.constant 0 : index
    %c0_0 = arith.constant 0 : index
    %0 = vector.load %arg1[%c0, %c0_0] : memref<8x42xf32, #tpu.memory_space<vmem>>, vector<8x42xf32>
    %c0_1 = arith.constant 0 : index
    %c0_2 = arith.constant 0 : index
    %1 = vector.load %arg2[%c0_1, %c0_2] : memref<42x7xf32, #tpu.memory_space<vmem>>, vector<42x7xf32>
    %cst = arith.constant dense<0.000000e+00> : vector<8x7xf32>
    %2 = tpu.matmul %0, %1, %cst {dimension_numbers = #tpu.dot_dimension_numbers<[1], [0], [0], [1], [0, 0, 1, 1], [], []>} : vector<8x42xf32>, vector<42x7xf32>, vector<8x7xf32> -> vector<8x7xf32>
    %c0_3 = arith.constant 0 : index
    %c0_4 = arith.constant 0 : index
    %3 = vector.load %arg3[%c0_3, %c0_4] : memref<1x7xf32, #tpu.memory_space<vmem>>, vector<1x7xf32>
    %4 = vector.broadcast %3 : vector<1x7xf32> to vector<8x7xf32>
    %5 = arith.addf %2, %4 : vector<8x7xf32>
    %cst_5 = arith.constant 0.000000e+00 : f32
    %6 = vector.broadcast %cst_5 : f32 to vector<8x7xf32>
    %7 = arith.maximumf %5, %6 : vector<8x7xf32>
    %c0_6 = arith.constant 0 : index
    %c0_7 = arith.constant 0 : index
    %8 = vector.load %arg4[%c0_6, %c0_7] : memref<7x7xf32, #tpu.memory_space<vmem>>, vector<7x7xf32>
    %cst_8 = arith.constant dense<0.000000e+00> : vector<8x7xf32>
    %9 = tpu.matmul %7, %8, %cst_8 {dimension_numbers = #tpu.dot_dimension_numbers<[1], [0], [0], [1], [0, 0, 1, 1], [], []>} : vector<8x7xf32>, vector<7x7xf32>, vector<8x7xf32> -> vector<8x7xf32>
    %c0_9 = arith.constant 0 : index
    %c0_10 = arith.constant 0 : index
    %10 = vector.load %arg5[%c0_9, %c0_10] : memref<1x7xf32, #tpu.memory_space<vmem>>, vector<1x7xf32>
    %11 = vector.broadcast %10 : vector<1x7xf32> to vector<8x7xf32>
    %12 = arith.addf %9, %11 : vector<8x7xf32>
    %cst_11 = arith.constant 0.000000e+00 : f32
    %13 = vector.broadcast %cst_11 : f32 to vector<8x7xf32>
    %14 = arith.maximumf %12, %13 : vector<8x7xf32>
    %c0_12 = arith.constant 0 : index
    %c0_13 = arith.constant 0 : index
    %15 = vector.load %arg6[%c0_12, %c0_13] : memref<7x7xf32, #tpu.memory_space<vmem>>, vector<7x7xf32>
    %cst_14 = arith.constant dense<0.000000e+00> : vector<7x8xf32>
    %16 = tpu.matmul %15, %14, %cst_14 {dimension_numbers = #tpu.dot_dimension_numbers<[1], [1], [0], [0], [0, 0, 1, 0], [], []>} : vector<7x7xf32>, vector<8x7xf32>, vector<7x8xf32> -> vector<7x8xf32>
    %c0_15 = arith.constant 0 : index
    %c0_16 = arith.constant 0 : index
    %17 = vector.load %arg7[%c0_15, %c0_16] : memref<7x1xf32, #tpu.memory_space<vmem>>, vector<7x1xf32>
    %18 = vector.broadcast %17 : vector<7x1xf32> to vector<7x8xf32>
    %19 = arith.addf %16, %18 : vector<7x8xf32>
    %c0_17 = arith.constant 0 : index
    %c0_18 = arith.constant 0 : index
    %20 = vector.load %arg8[%c0_17, %c0_18] : memref<7x8xf32, #tpu.memory_space<vmem>>, vector<7x8xf32>
    tpu.vector_store %arg8[%c0_17, %c0_18], %19 {strides = array<i32>} : memref<7x8xf32, #tpu.memory_space<vmem>>, vector<7x8xf32>,
    return
  }
  func.func @transform_0(%arg0: i32) -> (i32, i32) {
    %c0_i32 = arith.constant 0 : i32
    %c0_i32_0 = arith.constant 0 : i32
    return %arg0, %c0_i32 : i32, i32
  }
  func.func @transform_1(%arg0: i32) -> (i32, i32) {
    %c0_i32 = arith.constant 0 : i32
    %c0_i32_0 = arith.constant 0 : i32
    %c0_i32_1 = arith.constant 0 : i32
    return %c0_i32, %c0_i32_0 : i32, i32
  }
  func.func @transform_2(%arg0: i32) -> (i32, i32) {
    %c0_i32 = arith.constant 0 : i32
    %c0_i32_0 = arith.constant 0 : i32
    %c0_i32_1 = arith.constant 0 : i32
    return %c0_i32, %c0_i32_0 : i32, i32
  }
  func.func @transform_3(%arg0: i32) -> (i32, i32) {
    %c0_i32 = arith.constant 0 : i32
    %c0_i32_0 = arith.constant 0 : i32
    %c0_i32_1 = arith.constant 0 : i32
    return %c0_i32, %c0_i32_0 : i32, i32
  }
  func.func @transform_4(%arg0: i32) -> (i32, i32) {
    %c0_i32 = arith.constant 0 : i32
    %c0_i32_0 = arith.constant 0 : i32
    %c0_i32_1 = arith.constant 0 : i32
    return %c0_i32, %c0_i32_0 : i32, i32
  }
  func.func @transform_5(%arg0: i32) -> (i32, i32) {
    %c0_i32 = arith.constant 0 : i32
    %c0_i32_0 = arith.constant 0 : i32
    %c0_i32_1 = arith.constant 0 : i32
    return %c0_i32, %c0_i32_0 : i32, i32
  }
  func.func @transform_6(%arg0: i32) -> (i32, i32) {
    %c0_i32 = arith.constant 0 : i32
    %c0_i32_0 = arith.constant 0 : i32
    %c0_i32_1 = arith.constant 0 : i32
    return %c0_i32, %c0_i32_0 : i32, i32
  }
  func.func @transform_7(%arg0: i32) -> (i32, i32) {
    %c0_i32 = arith.constant 0 : i32
    %c0_i32_0 = arith.constant 0 : i32
    return %c0_i32, %arg0 : i32, i32
  }
}

</mosaic_0001>

<llo_original>
// kernel: tpu_custom_call.1
$region0: #{tpu_custom_call.1}
  #allocation0 [shape = 'u32[]', space=smem, size = 0x4, offset = 0x4, fixed_abs, tag = 'smem constant byte address 0x4 - core index']
  #allocation1 [shape = 'u32[72,128]{1,0:T(1,128)}', space=vmem, size = 0x9000, scoped, tag = 'internal scratch']
  %s0 = inlined_call_operand.vmem [shape: f32[8,42], index: 0, kind: input, shape index: {}]
  %s1 = inlined_call_operand.vmem [shape: f32[42,7], index: 1, kind: input, shape index: {}]
  %s2 = inlined_call_operand.vmem [shape: f32[1,7], index: 2, kind: input, shape index: {}]
  %s3 = inlined_call_operand.vmem [shape: f32[7,7], index: 3, kind: input, shape index: {}]
  %s4 = inlined_call_operand.vmem [shape: f32[1,7], index: 4, kind: input, shape index: {}]
  %s5 = inlined_call_operand.vmem [shape: f32[7,7], index: 5, kind: input, shape index: {}]
  %s6 = inlined_call_operand.vmem [shape: f32[7,1], index: 6, kind: input, shape index: {}]
  %s7 = inlined_call_operand.hbm [shape: f32[7,8], index: 7, kind: output, shape index: {}]
  %s8 = sld [smem:[#allocation0]]
  $region38: #{tpu_custom_call.1} parent=0
    _
  %s10 = ssub.s32 1, %s8
  %s11 = scalar_select 0, %s10, %s8
  $region1: #{tpu_custom_call.1} parent=0
    #allocation2 [shape = 'u8[4096]{0}', space=vmem, size = 0x1000, scoped, tag = 'output window, operand 0, single buffered']
    #allocation3 [shape = 's32[1]{0}', space=sflag, size = 0x4, scoped, tag = 'scoped memory for tpu_custom_call.1']
    %12 = vsyncpa [#allocation3], 0
    // Predicated region
    $region2: #{tpu_custom_call.1} parent=1 // pred_check
      _
    $region3: #{tpu_custom_call.1} parent=1 // pred_check_branch
      %14 = sbr.rel (0) target = $region5
    $region4: #{tpu_custom_call.1} parent=1 // pred_region
      _
    $region5: #{tpu_custom_call.1} parent=1 // pred_fallthru
      _
    // Predicated region
    $region6: #{tpu_custom_call.1} parent=1 // pred_check
      _
    $region7: #{tpu_custom_call.1} parent=1 // pred_check_branch
      %16 = sbr.rel (0) target = $region9
    $region8: #{tpu_custom_call.1} parent=1 // pred_region
      _
    $region9: #{tpu_custom_call.1} parent=1 // pred_fallthru
      _
    // Predicated region
    $region10: #{tpu_custom_call.1} parent=1 // pred_check
      _
    $region11: #{tpu_custom_call.1} parent=1 // pred_check_branch
      %18 = sbr.rel (0) target = $region13
    $region12: #{tpu_custom_call.1} parent=1 // pred_region
      _
    $region13: #{tpu_custom_call.1} parent=1 // pred_fallthru
      _
    // Predicated region
    $region14: #{tpu_custom_call.1} parent=1 // pred_check
      _
    $region15: #{tpu_custom_call.1} parent=1 // pred_check_branch
      %20 = sbr.rel (0) target = $region17
    $region16: #{tpu_custom_call.1} parent=1 // pred_region
      _
    $region17: #{tpu_custom_call.1} parent=1 // pred_fallthru
      _
    // Predicated region
    $region18: #{tpu_custom_call.1} parent=1 // pred_check
      _
    $region19: #{tpu_custom_call.1} parent=1 // pred_check_branch
      %22 = sbr.rel (0) target = $region21
    $region20: #{tpu_custom_call.1} parent=1 // pred_region
      _
    $region21: #{tpu_custom_call.1} parent=1 // pred_fallthru
      _
    // Predicated region
    $region22: #{tpu_custom_call.1} parent=1 // pred_check
      _
    $region23: #{tpu_custom_call.1} parent=1 // pred_check_branch
      %24 = sbr.rel (0) target = $region25
    $region24: #{tpu_custom_call.1} parent=1 // pred_region
      _
    $region25: #{tpu_custom_call.1} parent=1 // pred_fallthru
      _
    // Predicated region
    $region26: #{tpu_custom_call.1} parent=1 // pred_check
      _
    $region27: #{tpu_custom_call.1} parent=1 // pred_check_branch
      %26 = sbr.rel (0) target = $region29
    $region28: #{tpu_custom_call.1} parent=1 // pred_region
      _
    $region29: #{tpu_custom_call.1} parent=1 // pred_fallthru
      _
    %v27 = vld [vmem:[%s0] sm:$0xff]
    %v28 = vld [vmem:[%s1] sm:$0xff]
    %v29 = vld [vmem:[%s1 + $0x8] sm:$0xff]
    %v30 = vld [vmem:[%s1 + $0x10] sm:$0xff]
    %v31 = vld [vmem:[%s1 + $0x18] sm:$0xff]
    %v32 = vld [vmem:[%s1 + $0x20] sm:$0xff]
    %v33 = vld [vmem:[%s1 + $0x28] sm:$0x3]
    %v34 = vld [vmem:[%s2] sm:$0x1]
    %v36 = vperm.slane %v34, 0
    %vm38 = vcmask 343040
    %v40 = vsel %vm38, %v27, 0
    %vm42 = vcmask 1041408
    %v44 = vsel %vm42, %v33, 0
    %46 = vmatpush.msra.mxu0 0.0
    %47 = vmatpush.msra.mxu0 0.0
    %48 = vmatpush.msra.mxu0 0.0
    %49 = vmatpush.msra.mxu0 0.0
    %50 = vmatpush.msra.mxu0 0.0
    %51 = vmatpush.msra.mxu0 0.0
    %52 = vmatpush.msra.mxu0 0.0
    %53 = vmatpush.msra.mxu0 0.0
    %54 = vmatpush.msra.mxu0 0.0
    %55 = vmatpush.msra.mxu0 0.0
    %56 = vmatpush.msra.mxu0 %v44
    %57 = vmatpush.msra.mxu0 %v32
    %58 = vmatpush.msra.mxu0 %v31
    %59 = vmatpush.msra.mxu0 %v30
    %60 = vmatpush.msra.mxu0 %v29
    %61 = vmatpush.msra.mxu0 %v28
    %62 = vmatmul.f32.gmra.mxu0 %v40
    %v63 = vpop.f32.mrf.mxu0
    %v64 = vadd.f32 %v36, %v63
    %65 = vdwg.mxu0
    %v66 = vmax.f32 %v64, 0.0
    %v67 = vld [vmem:[%s3] sm:$0x7f]
    %v68 = vld [vmem:[%s4] sm:$0x1]
    %v70 = vperm.slane %v68, 0
    %vm72 = vcmask 56320
    %v74 = vsel %vm72, %v66, 0
    %vm76 = vcmask 1046528
    %v78 = vsel %vm76, %v67, 0
    %80 = vmatpush.msra.mxu0 0.0
    %81 = vmatpush.msra.mxu0 0.0
    %82 = vmatpush.msra.mxu0 0.0
    %83 = vmatpush.msra.mxu0 0.0
    %84 = vmatpush.msra.mxu0 0.0
    %85 = vmatpush.msra.mxu0 0.0
    %86 = vmatpush.msra.mxu0 0.0
    %87 = vmatpush.msra.mxu0 0.0
    %88 = vmatpush.msra.mxu0 0.0
    %89 = vmatpush.msra.mxu0 0.0
    %90 = vmatpush.msra.mxu0 0.0
    %91 = vmatpush.msra.mxu0 0.0
    %92 = vmatpush.msra.mxu0 0.0
    %93 = vmatpush.msra.mxu0 0.0
    %94 = vmatpush.msra.mxu0 0.0
    %95 = vmatpush.msra.mxu0 %v78
    %96 = vmatmul.f32.gmra.mxu0 %v74
    %v97 = vpop.f32.mrf.mxu0
    %v98 = vadd.f32 %v70, %v97
    %99 = vdwg.mxu0
    %v100 = vmax.f32 %v98, 0.0
    %v101 = vld [vmem:[%s5] sm:$0x7f]
    %v102 = vld [vmem:[%s6] sm:$0x7f]
    %104 = vset.pattern.permute.xlu0 0
    %105 = vperm.xlu0 %104, %v102
    %v106 = vpop.permute.xlu0 %105
    %v109 = vsel %vm72, %v101, 0
    %v112 = vsel %vm72, %v100, 0
    %114 = vmatpush.xpose.msra.mxu0 0.0
    %115 = vmatpush.xpose.msra.mxu0 0.0
    %116 = vmatpush.xpose.msra.mxu0 0.0
    %117 = vmatpush.xpose.msra.mxu0 0.0
    %118 = vmatpush.xpose.msra.mxu0 0.0
    %119 = vmatpush.xpose.msra.mxu0 0.0
    %120 = vmatpush.xpose.msra.mxu0 0.0
    %121 = vmatpush.xpose.msra.mxu0 0.0
    %122 = vmatpush.xpose.msra.mxu0 0.0
    %123 = vmatpush.xpose.msra.mxu0 0.0
    %124 = vmatpush.xpose.msra.mxu0 0.0
    %125 = vmatpush.xpose.msra.mxu0 0.0
    %126 = vmatpush.xpose.msra.mxu0 0.0
    %127 = vmatpush.xpose.msra.mxu0 0.0
    %128 = vmatpush.xpose.msra.mxu0 0.0
    %129 = vmatpush.xpose.msra.mxu0 %v112
    %130 = vmatmul.f32.gmra.mxu0 %v109
    %v131 = vpop.f32.mrf.mxu0
    %v132 = vadd.f32 %v106, %v131
    %133 = vdwg.mxu0
    %vm134 = vcmask 63488
    %135 = vst.msk [vmem:[#allocation2] sm:$0x7f] %vm134, %v132
    // Predicated region
    $region30: #{tpu_custom_call.1} parent=1 // pred_check
      _
    $region31: #{tpu_custom_call.1} parent=1 // pred_check_branch
      %137 = sbr.rel (0) target = $region33
    $region32: #{tpu_custom_call.1} parent=1 // pred_region
      %139 = vsyncadd [#allocation3], 0
      %s141 = sshll.u32 [#allocation2], 4
      %s142 = int_to_ptr.vmem [resolvable:$true] %s141
      %s143 = sshll.u32 %s7, 4
      %s144 = int_to_ptr.hbm [resolvable:$true] %s143
      %146 = dma.vmem_to_hbm [thread:$0]  %s142, 128, %s144, [#allocation3]
    $region33: #{tpu_custom_call.1} parent=1 // pred_fallthru
      _
    // Predicated region
    $region34: #{tpu_custom_call.1} parent=1 // pred_check
      _
    $region35: #{tpu_custom_call.1} parent=1 // pred_check_branch
      %148 = sbr.rel (0) target = $region37
    $region36: #{tpu_custom_call.1} parent=1 // pred_region
      %150 = dma.done [#allocation3], 128
    $region37: #{tpu_custom_call.1} parent=1 // pred_fallthru
      _
    %151 = vsyncpa [#allocation3], 1

</llo_original>
